<compile_context>
chip_gen: v5e
topology: v5e:2x2
jax: 0.10.0
libtpu: 0.0.40
codegen_flags: <defaults>
</compile_context>

<pallas_src>
import functools
from math import ceil, floor

import numpy as np
import jax
import jax.numpy as jnp
from jax.experimental import pallas as pl
from jax.experimental.pallas import tpu as pltpu


def _round_up(x: int, m: int) -> int:
    return ((x + m - 1) // m) * m


# ----------------------------------------------------------------------------
# librosa-style mel filterbank (slaney scale, slaney norm) built in numpy
# ----------------------------------------------------------------------------
def _hz_to_mel(freqs):
    freqs = np.asarray(freqs, dtype=np.float64)
    f_sp = 200.0 / 3
    mels = freqs / f_sp
    min_log_hz = 1000.0
    min_log_mel = min_log_hz / f_sp
    logstep = np.log(6.4) / 27.0
    mels = np.where(
        freqs >= min_log_hz,
        min_log_mel + np.log(np.maximum(freqs, 1e-10) / min_log_hz) / logstep,
        mels,
    )
    return mels


def _mel_to_hz(mels):
    mels = np.asarray(mels, dtype=np.float64)
    f_sp = 200.0 / 3
    freqs = f_sp * mels
    min_log_hz = 1000.0
    min_log_mel = min_log_hz / f_sp
    logstep = np.log(6.4) / 27.0
    freqs = np.where(
        mels >= min_log_mel,
        min_log_hz * np.exp(logstep * (mels - min_log_mel)),
        freqs,
    )
    return freqs


def mel_filter(sr, n_fft, n_mels, fmin=0.0, fmax=None):
    if fmax is None:
        fmax = sr / 2.0
    n_freq = n_fft // 2 + 1
    fftfreqs = np.linspace(0.0, sr / 2.0, n_freq)
    mel_pts = np.linspace(_hz_to_mel(fmin), _hz_to_mel(fmax), n_mels + 2)
    mel_f = _mel_to_hz(mel_pts)
    fdiff = np.diff(mel_f)
    ramps = mel_f[:, None] - fftfreqs[None, :]
    weights = np.zeros((n_mels, n_freq), dtype=np.float64)
    for i in range(n_mels):
        lower = -ramps[i] / fdiff[i]
        upper = ramps[i + 2] / fdiff[i + 1]
        weights[i] = np.maximum(0.0, np.minimum(lower, upper))
    enorm = 2.0 / (mel_f[2 : n_mels + 2] - mel_f[:n_mels])  # slaney norm
    weights *= enorm[:, None]
    return weights.astype(np.float32)


# ----------------------------------------------------------------------------
# Pallas kernel: fused windowed-DFT power spectrum + mel projection + log
# ----------------------------------------------------------------------------
def _melspec_kernel(frames_ref, dftw_ref, melT_ref, out_ref, *,
                    f_pad, eps, clip_val):
    x = frames_ref[...]                                               # (TM, n_fft)
    # single MXU matmul against the fused [cos | sin] windowed-DFT matrix
    ri = jnp.dot(x, dftw_ref[...], preferred_element_type=jnp.float32)  # (TM, 2*Fp)
    re = ri[:, :f_pad]                                                # lane-aligned
    im = ri[:, f_pad:]                                                # static slices
    power = re * re + im * im + eps                                   # |STFT|^2 + eps
    mel = jnp.dot(power, melT_ref[...], preferred_element_type=jnp.float32)
    out_ref[...] = jnp.log(jnp.maximum(mel, clip_val))                # compress_drange


class MelSpecPallas:
    def __init__(self, seq_len, n_mels=128, n_fft=1024, sr=22050,
                 hop_length=256, win_length=1024, fmin=0.0, fmax=None,
                 center=False, eps=1e-9, row_tile=256,
                 weight_dtype=jnp.float32):
        assert not center, "center=False only (matches module default)"
        assert win_length == n_fft, "win_length == n_fft assumed"
        self.seq_len = seq_len
        self.n_mels = n_mels
        self.n_fft = n_fft
        self.sr = sr
        self.hop_length = hop_length
        self.win_length = win_length
        self.eps = float(eps)
        self.clip_val = 1e-5
        self.row_tile = int(row_tile)
        self.weight_dtype = jnp.dtype(weight_dtype)

        # torch.hann_window default is periodic=True
        n = np.arange(win_length, dtype=np.float64)
        window = 0.5 - 0.5 * np.cos(2.0 * np.pi * n / win_length)
        self.window_np = window.astype(np.float32)

        n_freq = n_fft // 2 + 1
        self.n_freq = n_freq

        # windowed DFT matrices: re = frames @ cosw ; im = frames @ sinw
        t = np.arange(n_fft, dtype=np.float64)
        k = np.arange(n_freq, dtype=np.float64)
        ang = 2.0 * np.pi * np.outer(t, k) / n_fft            # (n_fft, n_freq)
        cosw = (window[:, None] * np.cos(ang)).astype(np.float32)
        sinw = (window[:, None] * np.sin(ang)).astype(np.float32)

        mel = mel_filter(sr, n_fft, n_mels, fmin, fmax)        # (n_mels, n_freq)
        self.mel_np = mel

        # Crop the frequency axis to the last column with nonzero mel weight
        # (dropped columns contribute exactly zero to the mel projection;
        #  with fmax == sr/2 this removes the Nyquist bin), then lane-pad.
        col_nz = np.nonzero(mel.sum(axis=0) > 0)[0]
        crop = int(col_nz[-1]) + 1 if col_nz.size else n_freq
        self.f_crop = crop
        self.f_pad = _round_up(max(crop, 1), 128)
        fpad_extra = self.f_pad - crop

        cosw_c = np.pad(cosw[:, :crop], ((0, 0), (0, fpad_extra)))
        sinw_c = np.pad(sinw[:, :crop], ((0, 0), (0, fpad_extra)))
        # fused [cos | sin] RHS -> one MXU matmul in the kernel
        dftw = np.concatenate([cosw_c, sinw_c], axis=1)        # (n_fft, 2*f_pad)

        # lane-pad the mel/output axis to a multiple of 128 (unmasked stores)
        self.m_pad = _round_up(n_mels, 128)
        melT = np.zeros((self.f_pad, self.m_pad), dtype=np.float32)
        melT[:crop, :n_mels] = mel[:, :crop].T

        # DFT weights may optionally be bf16 (f32 accumulation); mel^T stays f32.
        self.dftw = jnp.asarray(dftw, dtype=self.weight_dtype)
        self.melT = jnp.asarray(melT, dtype=jnp.float32)

    @property
    def padding(self):
        amount = self.n_fft - self.hop_length
        return (floor(amount / 2), ceil(amount / 2))

    def __call__(self, y):
        # y: (B, seq_len) float32
        B = y.shape[0]
        pad_l, pad_r = self.padding
        yp = jnp.pad(y.astype(jnp.float32), ((0, 0), (pad_l, pad_r)),
                     mode="reflect")
        L = yp.shape[1]
        T = 1 + (L - self.n_fft) // self.hop_length

        # framing (glue, done in plain JAX): (B, T, n_fft) -> (B*T, n_fft)
        # TODO(synk): stream hop-strided windows inside the kernel (shifted-chunk
        # matmul / pl.ds on the padded signal) to cut input HBM traffic by
        # ~n_fft/hop_length; kept as an XLA gather here.
        idx = (np.arange(T)[:, None] * self.hop_length
               + np.arange(self.n_fft)[None, :])
        frames = yp[:, idx].reshape(B * T, self.n_fft)

        R = B * T
        TM = min(self.row_tile, _round_up(R, 8))   # big row tile, multiple of 8
        Rp = _round_up(R, TM)
        if Rp != R:
            frames = jnp.pad(frames, ((0, Rp - R), (0, 0)))
        frames = frames.astype(self.weight_dtype)

        kernel = functools.partial(_melspec_kernel, f_pad=self.f_pad,
                                   eps=self.eps, clip_val=self.clip_val)

        # VMEM budget (constants fetched once; frames/out double-buffered;
        # ri/power temporaries) -- keep an explicit, conservative limit so the
        # tile also fits v7x's tighter scoped-VMEM budget.
        w_bytes = (self.dftw.size * self.dftw.dtype.itemsize
                   + self.melT.size * self.melT.dtype.itemsize)
        tile_bytes = (TM * self.n_fft * frames.dtype.itemsize     # frames tile
                      + TM * self.m_pad * 4                       # out tile
                      + 3 * TM * self.f_pad * 4)                  # ri + power temps
        vmem_limit = int(min(max(2 * (w_bytes + 2 * tile_bytes), 32 * 2**20),
                             64 * 2**20))

        flops = (2 * Rp * self.n_fft * (2 * self.f_pad)
                 + 2 * Rp * self.f_pad * self.m_pad)
        bytes_accessed = (Rp * self.n_fft * frames.dtype.itemsize
                          + w_bytes + Rp * self.m_pad * 4)

        out = pl.pallas_call(
            kernel,
            out_shape=jax.ShapeDtypeStruct((Rp, self.m_pad), jnp.float32),
            grid_spec=pltpu.PrefetchScalarGridSpec(
                num_scalar_prefetch=0,
                grid=(Rp // TM,),
                in_specs=[
                    pl.BlockSpec((TM, self.n_fft), lambda i: (i, 0)),
                    # constant operands: block index never changes -> DMA'd once
                    pl.BlockSpec((self.n_fft, 2 * self.f_pad), lambda i: (0, 0)),
                    pl.BlockSpec((self.f_pad, self.m_pad), lambda i: (0, 0)),
                ],
                out_specs=pl.BlockSpec((TM, self.m_pad), lambda i: (i, 0)),
            ),
            compiler_params=pltpu.CompilerParams(
                dimension_semantics=("parallel",),
                vmem_limit_bytes=vmem_limit),
            cost_estimate=pl.CostEstimate(
                flops=int(flops),
                transcendentals=int(Rp * self.m_pad),
                bytes_accessed=int(bytes_accessed)),
        )(frames, self.dftw, self.melT)

        out = out[:R, :self.n_mels].reshape(B, T, self.n_mels)
        return jnp.transpose(out, (0, 2, 1))  # (B, n_mels, n_frames)


# ----------------------------------------------------------------------------
# pure-JAX reference (rfft path) for a sanity check
# ----------------------------------------------------------------------------
def reference_melspec(y, ms: MelSpecPallas):
    pad_l, pad_r = ms.padding
    yp = jnp.pad(y, ((0, 0), (pad_l, pad_r)), mode="reflect")
    T = 1 + (yp.shape[1] - ms.n_fft) // ms.hop_length
    idx = (np.arange(T)[:, None] * ms.hop_length
           + np.arange(ms.n_fft)[None, :])
    frames = yp[:, idx] * jnp.asarray(ms.window_np)            # (B, T, n_fft)
    spec = jnp.fft.rfft(frames.astype(jnp.float32), axis=-1)   # (B, T, n_freq)
    power = jnp.abs(spec) ** 2 + ms.eps
    mel = jnp.einsum("mf,btf->bmt", jnp.asarray(ms.mel_np), power,
                     precision=jax.lax.Precision.HIGHEST)
    return jnp.log(jnp.maximum(mel, ms.clip_val))


if __name__ == "__main__":
    # small config consistent with the module (scaled-down n_fft / n_mels)
    B = 2
    seq_len = 1024
    ms = MelSpecPallas(seq_len=seq_len, n_mels=64, n_fft=256, sr=22050,
                       hop_length=64, win_length=256, fmin=0.0, fmax=None,
                       center=False, eps=1e-9)

    key = jax.random.PRNGKey(0)
    y = jax.random.normal(key, (B, seq_len), dtype=jnp.float32)

    out = ms(y)
    out = jax.block_until_ready(out)

    ref = jax.block_until_ready(reference_melspec(y, ms))
    assert out.shape == ref.shape, (out.shape, ref.shape)
    assert bool(jnp.all(jnp.isfinite(out)))
    max_diff = float(jnp.max(jnp.abs(out - ref)))
    if max_diff > 5e-2:
        raise AssertionError(f"mismatch vs reference: max|diff|={max_diff}")

    print("KERNEL_OK")
</pallas_src>

<mosaic_0001>
module attributes {stable_mosaic.version = 11 : i64} {
  func.func @_melspec_kernel(%arg0: i32, %arg1: memref<32x256xf32, #tpu.memory_space<vmem>>, %arg2: memref<256x256xf32, #tpu.memory_space<vmem>>, %arg3: memref<128x128xf32, #tpu.memory_space<vmem>>, %arg4: memref<32x128xf32, #tpu.memory_space<vmem>>) attributes {dimension_semantics = [#tpu.dimension_semantics<parallel>], iteration_bounds = array<i64: 1>, scalar_prefetch = 0 : i64, scratch_operands = 0 : i64, tpu.core_type = #tpu.core_type<tc>, window_params = [{transform_indices = @transform_0, window_bounds = array<i64: 32, 256>}, {pipeline_mode = #tpu.pipeline_mode<synchronous>, transform_indices = @transform_1, window_bounds = array<i64: 256, 256>}, {pipeline_mode = #tpu.pipeline_mode<synchronous>, transform_indices = @transform_2, window_bounds = array<i64: 128, 128>}, {transform_indices = @transform_3, window_bounds = array<i64: 32, 128>}]} {
    %c0 = arith.constant 0 : index
    %c0_0 = arith.constant 0 : index
    %0 = vector.load %arg1[%c0, %c0_0] : memref<32x256xf32, #tpu.memory_space<vmem>>, vector<32x256xf32>
    %c0_1 = arith.constant 0 : index
    %c0_2 = arith.constant 0 : index
    %1 = vector.load %arg2[%c0_1, %c0_2] : memref<256x256xf32, #tpu.memory_space<vmem>>, vector<256x256xf32>
    %cst = arith.constant dense<0.000000e+00> : vector<32x256xf32>
    %2 = tpu.matmul %0, %1, %cst {dimension_numbers = #tpu.dot_dimension_numbers<[1], [0], [0], [1], [0, 0, 1, 1], [], []>} : vector<32x256xf32>, vector<256x256xf32>, vector<32x256xf32> -> vector<32x256xf32>
    %3 = vector.extract_strided_slice %2 {offsets = [0, 0], sizes = [32, 128], strides = [1, 1]} : vector<32x256xf32> to vector<32x128xf32>
    %4 = vector.extract_strided_slice %2 {offsets = [0, 128], sizes = [32, 128], strides = [1, 1]} : vector<32x256xf32> to vector<32x128xf32>
    %5 = arith.mulf %3, %3 : vector<32x128xf32>
    %6 = arith.mulf %4, %4 : vector<32x128xf32>
    %7 = arith.addf %5, %6 : vector<32x128xf32>
    %cst_3 = arith.constant 9.99999971E-10 : f32
    %8 = vector.broadcast %cst_3 : f32 to vector<32x128xf32>
    %9 = arith.addf %7, %8 : vector<32x128xf32>
    %c0_4 = arith.constant 0 : index
    %c0_5 = arith.constant 0 : index
    %10 = vector.load %arg3[%c0_4, %c0_5] : memref<128x128xf32, #tpu.memory_space<vmem>>, vector<128x128xf32>
    %cst_6 = arith.constant dense<0.000000e+00> : vector<32x128xf32>
    %11 = tpu.matmul %9, %10, %cst_6 {dimension_numbers = #tpu.dot_dimension_numbers<[1], [0], [0], [1], [0, 0, 1, 1], [], []>} : vector<32x128xf32>, vector<128x128xf32>, vector<32x128xf32> -> vector<32x128xf32>
    %cst_7 = arith.constant 9.99999974E-6 : f32
    %12 = vector.broadcast %cst_7 : f32 to vector<32x128xf32>
    %13 = arith.maximumf %11, %12 : vector<32x128xf32>
    %14 = math.log %13 : vector<32x128xf32>
    %c0_8 = arith.constant 0 : index
    %c0_9 = arith.constant 0 : index
    %15 = vector.load %arg4[%c0_8, %c0_9] : memref<32x128xf32, #tpu.memory_space<vmem>>, vector<32x128xf32>
    tpu.vector_store %arg4[%c0_8, %c0_9], %14 {strides = array<i32>} : memref<32x128xf32, #tpu.memory_space<vmem>>, vector<32x128xf32>,
    return
  }
  func.func @transform_0(%arg0: i32) -> (i32, i32) {
    %c0_i32 = arith.constant 0 : i32
    %c0_i32_0 = arith.constant 0 : i32
    return %arg0, %c0_i32 : i32, i32
  }
  func.func @transform_1(%arg0: i32) -> (i32, i32) {
    %c0_i32 = arith.constant 0 : i32
    %c0_i32_0 = arith.constant 0 : i32
    %c0_i32_1 = arith.constant 0 : i32
    return %c0_i32, %c0_i32_0 : i32, i32
  }
  func.func @transform_2(%arg0: i32) -> (i32, i32) {
    %c0_i32 = arith.constant 0 : i32
    %c0_i32_0 = arith.constant 0 : i32
    %c0_i32_1 = arith.constant 0 : i32
    return %c0_i32, %c0_i32_0 : i32, i32
  }
  func.func @transform_3(%arg0: i32) -> (i32, i32) {
    %c0_i32 = arith.constant 0 : i32
    %c0_i32_0 = arith.constant 0 : i32
    return %arg0, %c0_i32 : i32, i32
  }
}

</mosaic_0001>

<llo_original>
// kernel: tpu_custom_call.1
$region0: #{tpu_custom_call.1}
  #allocation0 [shape = 'u32[]', space=smem, size = 0x4, offset = 0x4, fixed_abs, tag = 'smem constant byte address 0x4 - core index']
  #allocation1 [shape = 'u32[72,128]{1,0:T(1,128)}', space=vmem, size = 0x9000, scoped, tag = 'internal scratch']
  %s0 = inlined_call_operand.hbm [shape: f32[32,256], index: 0, kind: input, shape index: {}]
  %s1 = inlined_call_operand.hbm [shape: f32[256,256], index: 1, kind: input, shape index: {}]
  %s2 = inlined_call_operand.hbm [shape: f32[128,128], index: 2, kind: input, shape index: {}]
  %s3 = inlined_call_operand.hbm [shape: f32[32,128], index: 3, kind: output, shape index: {}]
  %s4 = sld [smem:[#allocation0]]
  $region34: #{tpu_custom_call.1} parent=0
    _
  %s6 = ssub.s32 1, %s4
  %s7 = scalar_select 0, %s6, %s4
  $region1: #{tpu_custom_call.1} parent=0
    #allocation2 [shape = 'u8[32768]{0}', space=vmem, size = 0x8000, scoped, tag = 'input window, operand 0, single buffered']
    #allocation3 [shape = 's32[1]{0}', space=sflag, size = 0x4, scoped, tag = 'scoped memory for tpu_custom_call.1']
    #allocation4 [shape = 's32[1]{0}', space=sflag, size = 0x4, scoped, tag = 'scoped memory for tpu_custom_call.1']
    #allocation5 [shape = 'u8[262144]{0}', space=vmem, size = 0x40000, scoped, tag = 'input window, operand 1, single buffered']
    #allocation6 [shape = 's32[1]{0}', space=sflag, size = 0x4, scoped, tag = 'scoped memory for tpu_custom_call.1']
    #allocation7 [shape = 'u8[65536]{0}', space=vmem, size = 0x10000, scoped, tag = 'input window, operand 2, single buffered']
    #allocation8 [shape = 'u8[16384]{0}', space=vmem, size = 0x4000, scoped, tag = 'output window, operand 0, single buffered']
    %8 = vsyncpa [#allocation3], 0
    %9 = vsyncpa [#allocation6], 0
    %10 = vsyncpa [#allocation4], 0
    // Predicated region
    $region2: #{tpu_custom_call.1} parent=1 // pred_check
      _
    $region3: #{tpu_custom_call.1} parent=1 // pred_check_branch
      %12 = sbr.rel (0) target = $region5
    $region4: #{tpu_custom_call.1} parent=1 // pred_region
      %14 = vsyncadd [#allocation3], 0
      %s15 = sshll.u32 %s0, 4
      %s16 = int_to_ptr.hbm [resolvable:$true] %s15
      %s17 = sshll.u32 [#allocation2], 4
      %s18 = int_to_ptr.vmem [resolvable:$true] %s17
      %23 = dma.hbm_to_vmem [thread:$0]  %s16, 1024, %s18, [#allocation3], 256, 256, 16
    $region5: #{tpu_custom_call.1} parent=1 // pred_fallthru
      _
    // Predicated region
    $region6: #{tpu_custom_call.1} parent=1 // pred_check
      _
    $region7: #{tpu_custom_call.1} parent=1 // pred_check_branch
      %25 = sbr.rel (0) target = $region9
    $region8: #{tpu_custom_call.1} parent=1 // pred_region
      %27 = vsyncadd [#allocation6], 0
      %s28 = sshll.u32 %s1, 4
      %s29 = int_to_ptr.hbm [resolvable:$true] %s28
      %s30 = sshll.u32 [#allocation5], 4
      %s31 = int_to_ptr.vmem [resolvable:$true] %s30
      %36 = dma.hbm_to_vmem [thread:$0]  %s29, 8192, %s31, [#allocation6], 256, 256, 16
    $region9: #{tpu_custom_call.1} parent=1 // pred_fallthru
      _
    // Predicated region
    $region10: #{tpu_custom_call.1} parent=1 // pred_check
      _
    $region11: #{tpu_custom_call.1} parent=1 // pred_check_branch
      %38 = sbr.rel (0) target = $region13
    $region12: #{tpu_custom_call.1} parent=1 // pred_region
      %40 = vsyncadd [#allocation6], 0
      %s41 = sshll.u32 %s2, 4
      %s42 = int_to_ptr.hbm [resolvable:$true] %s41
      %s43 = sshll.u32 [#allocation7], 4
      %s44 = int_to_ptr.vmem [resolvable:$true] %s43
      %49 = dma.hbm_to_vmem [thread:$0]  %s42, 2048, %s44, [#allocation6], 128, 128, 8
    $region13: #{tpu_custom_call.1} parent=1 // pred_fallthru
      _
    // Predicated region
    $region14: #{tpu_custom_call.1} parent=1 // pred_check
      _
    $region15: #{tpu_custom_call.1} parent=1 // pred_check_branch
      %51 = sbr.rel (0) target = $region17
    $region16: #{tpu_custom_call.1} parent=1 // pred_region
      %53 = dma.done [#allocation3], 1024
    $region17: #{tpu_custom_call.1} parent=1 // pred_fallthru
      _
    // Predicated region
    $region18: #{tpu_custom_call.1} parent=1 // pred_check
      _
    $region19: #{tpu_custom_call.1} parent=1 // pred_check_branch
      %55 = sbr.rel (0) target = $region21
    $region20: #{tpu_custom_call.1} parent=1 // pred_region
      %57 = dma.done [#allocation6], 8192
    $region21: #{tpu_custom_call.1} parent=1 // pred_fallthru
      _
    // Predicated region
    $region22: #{tpu_custom_call.1} parent=1 // pred_check
      _
    $region23: #{tpu_custom_call.1} parent=1 // pred_check_branch
      %59 = sbr.rel (0) target = $region25
    $region24: #{tpu_custom_call.1} parent=1 // pred_region
      %61 = dma.done [#allocation6], 2048
    $region25: #{tpu_custom_call.1} parent=1 // pred_fallthru
      _
    %v62 = vld [vmem:[#allocation2] sm:$0xff]
    %v63 = vld [vmem:[#allocation2 + $0x8] sm:$0xff]
    %v64 = vld [vmem:[#allocation2 + $0x10] sm:$0xff]
    %v65 = vld [vmem:[#allocation2 + $0x18] sm:$0xff]
    %v66 = vld [vmem:[#allocation2 + $0x20] sm:$0xff]
    %v67 = vld [vmem:[#allocation2 + $0x28] sm:$0xff]
    %v68 = vld [vmem:[#allocation2 + $0x30] sm:$0xff]
    %v69 = vld [vmem:[#allocation2 + $0x38] sm:$0xff]
    %v70 = vld [vmem:[#allocation5] sm:$0xff]
    %v71 = vld [vmem:[#allocation5 + $0x8] sm:$0xff]
    %v72 = vld [vmem:[#allocation5 + $0x10] sm:$0xff]
    %v73 = vld [vmem:[#allocation5 + $0x18] sm:$0xff]
    %v74 = vld [vmem:[#allocation5 + $0x20] sm:$0xff]
    %v75 = vld [vmem:[#allocation5 + $0x28] sm:$0xff]
    %v76 = vld [vmem:[#allocation5 + $0x30] sm:$0xff]
    %v77 = vld [vmem:[#allocation5 + $0x38] sm:$0xff]
    %v78 = vld [vmem:[#allocation5 + $0x40] sm:$0xff]
    %v79 = vld [vmem:[#allocation5 + $0x48] sm:$0xff]
    %v80 = vld [vmem:[#allocation5 + $0x50] sm:$0xff]
    %v81 = vld [vmem:[#allocation5 + $0x58] sm:$0xff]
    %v82 = vld [vmem:[#allocation5 + $0x60] sm:$0xff]
    %v83 = vld [vmem:[#allocation5 + $0x68] sm:$0xff]
    %v84 = vld [vmem:[#allocation5 + $0x70] sm:$0xff]
    %v85 = vld [vmem:[#allocation5 + $0x78] sm:$0xff]
    %v86 = vld [vmem:[#allocation5 + $0x80] sm:$0xff]
    %v87 = vld [vmem:[#allocation5 + $0x88] sm:$0xff]
    %v88 = vld [vmem:[#allocation5 + $0x90] sm:$0xff]
    %v89 = vld [vmem:[#allocation5 + $0x98] sm:$0xff]
    %v90 = vld [vmem:[#allocation5 + $0xa0] sm:$0xff]
    %v91 = vld [vmem:[#allocation5 + $0xa8] sm:$0xff]
    %v92 = vld [vmem:[#allocation5 + $0xb0] sm:$0xff]
    %v93 = vld [vmem:[#allocation5 + $0xb8] sm:$0xff]
    %v94 = vld [vmem:[#allocation5 + $0xc0] sm:$0xff]
    %v95 = vld [vmem:[#allocation5 + $0xc8] sm:$0xff]
    %v96 = vld [vmem:[#allocation5 + $0xd0] sm:$0xff]
    %v97 = vld [vmem:[#allocation5 + $0xd8] sm:$0xff]
    %v98 = vld [vmem:[#allocation5 + $0xe0] sm:$0xff]
    %v99 = vld [vmem:[#allocation5 + $0xe8] sm:$0xff]
    %v100 = vld [vmem:[#allocation5 + $0xf0] sm:$0xff]
    %v101 = vld [vmem:[#allocation5 + $0xf8] sm:$0xff]
    %v102 = vld [vmem:[#allocation5 + $0x100] sm:$0xff]
    %v103 = vld [vmem:[#allocation5 + $0x108] sm:$0xff]
    %v104 = vld [vmem:[#allocation5 + $0x110] sm:$0xff]
    %v105 = vld [vmem:[#allocation5 + $0x118] sm:$0xff]
    %v106 = vld [vmem:[#allocation5 + $0x120] sm:$0xff]
    %v107 = vld [vmem:[#allocation5 + $0x128] sm:$0xff]
    %v108 = vld [vmem:[#allocation5 + $0x130] sm:$0xff]
    %v109 = vld [vmem:[#allocation5 + $0x138] sm:$0xff]
    %v110 = vld [vmem:[#allocation5 + $0x140] sm:$0xff]
    %v111 = vld [vmem:[#allocation5 + $0x148] sm:$0xff]
    %v112 = vld [vmem:[#allocation5 + $0x150] sm:$0xff]
    %v113 = vld [vmem:[#allocation5 + $0x158] sm:$0xff]
    %v114 = vld [vmem:[#allocation5 + $0x160] sm:$0xff]
    %v115 = vld [vmem:[#allocation5 + $0x168] sm:$0xff]
    %v116 = vld [vmem:[#allocation5 + $0x170] sm:$0xff]
    %v117 = vld [vmem:[#allocation5 + $0x178] sm:$0xff]
    %v118 = vld [vmem:[#allocation5 + $0x180] sm:$0xff]
    %v119 = vld [vmem:[#allocation5 + $0x188] sm:$0xff]
    %v120 = vld [vmem:[#allocation5 + $0x190] sm:$0xff]
    %v121 = vld [vmem:[#allocation5 + $0x198] sm:$0xff]
    %v122 = vld [vmem:[#allocation5 + $0x1a0] sm:$0xff]
    %v123 = vld [vmem:[#allocation5 + $0x1a8] sm:$0xff]
    %v124 = vld [vmem:[#allocation5 + $0x1b0] sm:$0xff]
    %v125 = vld [vmem:[#allocation5 + $0x1b8] sm:$0xff]
    %v126 = vld [vmem:[#allocation5 + $0x1c0] sm:$0xff]
    %v127 = vld [vmem:[#allocation5 + $0x1c8] sm:$0xff]
    %v128 = vld [vmem:[#allocation5 + $0x1d0] sm:$0xff]
    %v129 = vld [vmem:[#allocation5 + $0x1d8] sm:$0xff]
    %v130 = vld [vmem:[#allocation5 + $0x1e0] sm:$0xff]
    %v131 = vld [vmem:[#allocation5 + $0x1e8] sm:$0xff]
    %v132 = vld [vmem:[#allocation5 + $0x1f0] sm:$0xff]
    %v133 = vld [vmem:[#allocation5 + $0x1f8] sm:$0xff]
    %134 = vmatpush.msra.mxu0 %v100
    %135 = vmatpush.msra.mxu0 %v98
    %136 = vmatpush.msra.mxu0 %v96
    %137 = vmatpush.msra.mxu0 %v94
    %138 = vmatpush.msra.mxu0 %v92
    %139 = vmatpush.msra.mxu0 %v90
    %140 = vmatpush.msra.mxu0 %v88
    %141 = vmatpush.msra.mxu0 %v86
    %142 = vmatpush.msra.mxu0 %v84
    %143 = vmatpush.msra.mxu0 %v82
    %144 = vmatpush.msra.mxu0 %v80
    %145 = vmatpush.msra.mxu0 %v78
    %146 = vmatpush.msra.mxu0 %v76
    %147 = vmatpush.msra.mxu0 %v74
    %148 = vmatpush.msra.mxu0 %v72
    %149 = vmatpush.msra.mxu0 %v70
    %150 = vmatmul.f32.gmra.mxu0 %v62
    %v151 = vpop.f32.mrf.mxu0
    %v152 = vadd.f32 0.0, %v151
    %153 = vmatmul.f32.gmra.mxu0 %v64
    %v154 = vpop.f32.mrf.mxu0
    %v155 = vadd.f32 0.0, %v154
    %156 = vmatmul.f32.gmra.mxu0 %v66
    %v157 = vpop.f32.mrf.mxu0
    %v158 = vadd.f32 0.0, %v157
    %159 = vmatmul.f32.gmra.mxu0 %v68
    %v160 = vpop.f32.mrf.mxu0
    %v161 = vadd.f32 0.0, %v160
    %162 = vdwg.mxu0
    %163 = vmatpush.msra.mxu0 %v132
    %164 = vmatpush.msra.mxu0 %v130
    %165 = vmatpush.msra.mxu0 %v128
    %166 = vmatpush.msra.mxu0 %v126
    %167 = vmatpush.msra.mxu0 %v124
    %168 = vmatpush.msra.mxu0 %v122
    %169 = vmatpush.msra.mxu0 %v120
    %170 = vmatpush.msra.mxu0 %v118
    %171 = vmatpush.msra.mxu0 %v116
    %172 = vmatpush.msra.mxu0 %v114
    %173 = vmatpush.msra.mxu0 %v112
    %174 = vmatpush.msra.mxu0 %v110
    %175 = vmatpush.msra.mxu0 %v108
    %176 = vmatpush.msra.mxu0 %v106
    %177 = vmatpush.msra.mxu0 %v104
    %178 = vmatpush.msra.mxu0 %v102
    %179 = vmatmul.f32.gmra.mxu0 %v63
    %v180 = vpop.f32.mrf.mxu0
    %v181 = vadd.f32 %v152, %v180
    %182 = vmatmul.f32.gmra.mxu0 %v65
    %v183 = vpop.f32.mrf.mxu0
    %v184 = vadd.f32 %v155, %v183
    %185 = vmatmul.f32.gmra.mxu0 %v67
    %v186 = vpop.f32.mrf.mxu0
    %v187 = vadd.f32 %v158, %v186
    %188 = vmatmul.f32.gmra.mxu0 %v69
    %v189 = vpop.f32.mrf.mxu0
    %v190 = vadd.f32 %v161, %v189
    %191 = vdwg.mxu0
    %192 = vmatpush.msra.mxu0 %v101
    %193 = vmatpush.msra.mxu0 %v99
    %194 = vmatpush.msra.mxu0 %v97
    %195 = vmatpush.msra.mxu0 %v95
    %196 = vmatpush.msra.mxu0 %v93
    %197 = vmatpush.msra.mxu0 %v91
    %198 = vmatpush.msra.mxu0 %v89
    %199 = vmatpush.msra.mxu0 %v87
    %200 = vmatpush.msra.mxu0 %v85
    %201 = vmatpush.msra.mxu0 %v83
    %202 = vmatpush.msra.mxu0 %v81
    %203 = vmatpush.msra.mxu0 %v79
    %204 = vmatpush.msra.mxu0 %v77
    %205 = vmatpush.msra.mxu0 %v75
    %206 = vmatpush.msra.mxu0 %v73
    %207 = vmatpush.msra.mxu0 %v71
    %208 = vmatmul.f32.gmra.mxu0 %v62
    %v209 = vpop.f32.mrf.mxu0
    %v210 = vadd.f32 0.0, %v209
    %211 = vmatmul.f32.gmra.mxu0 %v64
    %v212 = vpop.f32.mrf.mxu0
    %v213 = vadd.f32 0.0, %v212
    %214 = vmatmul.f32.gmra.mxu0 %v66
    %v215 = vpop.f32.mrf.mxu0
    %v216 = vadd.f32 0.0, %v215
    %217 = vmatmul.f32.gmra.mxu0 %v68
    %v218 = vpop.f32.mrf.mxu0
    %v219 = vadd.f32 0.0, %v218
    %220 = vdwg.mxu0
    %221 = vmatpush.msra.mxu0 %v133
    %222 = vmatpush.msra.mxu0 %v131
    %223 = vmatpush.msra.mxu0 %v129
    %224 = vmatpush.msra.mxu0 %v127
    %225 = vmatpush.msra.mxu0 %v125
    %226 = vmatpush.msra.mxu0 %v123
    %227 = vmatpush.msra.mxu0 %v121
    %228 = vmatpush.msra.mxu0 %v119
    %229 = vmatpush.msra.mxu0 %v117
    %230 = vmatpush.msra.mxu0 %v115
    %231 = vmatpush.msra.mxu0 %v113
    %232 = vmatpush.msra.mxu0 %v111
    %233 = vmatpush.msra.mxu0 %v109
    %234 = vmatpush.msra.mxu0 %v107
    %235 = vmatpush.msra.mxu0 %v105
    %236 = vmatpush.msra.mxu0 %v103
    %237 = vmatmul.f32.gmra.mxu0 %v63
    %v238 = vpop.f32.mrf.mxu0
    %v239 = vadd.f32 %v210, %v238
    %240 = vmatmul.f32.gmra.mxu0 %v65
    %v241 = vpop.f32.mrf.mxu0
    %v242 = vadd.f32 %v213, %v241
    %243 = vmatmul.f32.gmra.mxu0 %v67
    %v244 = vpop.f32.mrf.mxu0
    %v245 = vadd.f32 %v216, %v244
    %246 = vmatmul.f32.gmra.mxu0 %v69
    %v247 = vpop.f32.mrf.mxu0
    %v248 = vadd.f32 %v219, %v247
    %249 = vdwg.mxu0
    %v250 = vmul.f32 %v181, %v181
    %v251 = vmul.f32 %v184, %v184
    %v252 = vmul.f32 %v187, %v187
    %v253 = vmul.f32 %v190, %v190
    %v254 = vmul.f32 %v239, %v239
    %v255 = vmul.f32 %v242, %v242
    %v256 = vmul.f32 %v245, %v245
    %v257 = vmul.f32 %v248, %v248
    %v258 = vadd.f32 %v250, %v254
    %v259 = vadd.f32 %v251, %v255
    %v260 = vadd.f32 %v252, %v256
    %v261 = vadd.f32 %v253, %v257
    %v262 = vadd.f32 %v258, 1e-09
    %v263 = vadd.f32 %v259, 1e-09
    %v264 = vadd.f32 %v260, 1e-09
    %v265 = vadd.f32 %v261, 1e-09
    %v266 = vld [vmem:[#allocation7] sm:$0xff]
    %v267 = vld [vmem:[#allocation7 + $0x8] sm:$0xff]
    %v268 = vld [vmem:[#allocation7 + $0x10] sm:$0xff]
    %v269 = vld [vmem:[#allocation7 + $0x18] sm:$0xff]
    %v270 = vld [vmem:[#allocation7 + $0x20] sm:$0xff]
    %v271 = vld [vmem:[#allocation7 + $0x28] sm:$0xff]
    %v272 = vld [vmem:[#allocation7 + $0x30] sm:$0xff]
    %v273 = vld [vmem:[#allocation7 + $0x38] sm:$0xff]
    %v274 = vld [vmem:[#allocation7 + $0x40] sm:$0xff]
    %v275 = vld [vmem:[#allocation7 + $0x48] sm:$0xff]
    %v276 = vld [vmem:[#allocation7 + $0x50] sm:$0xff]
    %v277 = vld [vmem:[#allocation7 + $0x58] sm:$0xff]
    %v278 = vld [vmem:[#allocation7 + $0x60] sm:$0xff]
    %v279 = vld [vmem:[#allocation7 + $0x68] sm:$0xff]
    %v280 = vld [vmem:[#allocation7 + $0x70] sm:$0xff]
    %v281 = vld [vmem:[#allocation7 + $0x78] sm:$0xff]
    %282 = vmatpush.msra.mxu0 %v281
    %283 = vmatpush.msra.mxu0 %v280
    %284 = vmatpush.msra.mxu0 %v279
    %285 = vmatpush.msra.mxu0 %v278
    %286 = vmatpush.msra.mxu0 %v277
    %287 = vmatpush.msra.mxu0 %v276
    %288 = vmatpush.msra.mxu0 %v275
    %289 = vmatpush.msra.mxu0 %v274
    %290 = vmatpush.msra.mxu0 %v273
    %291 = vmatpush.msra.mxu0 %v272
    %292 = vmatpush.msra.mxu0 %v271
    %293 = vmatpush.msra.mxu0 %v270
    %294 = vmatpush.msra.mxu0 %v269
    %295 = vmatpush.msra.mxu0 %v268
    %296 = vmatpush.msra.mxu0 %v267
    %297 = vmatpush.msra.mxu0 %v266
    %298 = vmatmul.f32.gmra.mxu0 %v262
    %v299 = vpop.f32.mrf.mxu0
    %v300 = vadd.f32 0.0, %v299
    %301 = vmatmul.f32.gmra.mxu0 %v263
    %v302 = vpop.f32.mrf.mxu0
    %v303 = vadd.f32 0.0, %v302
    %304 = vmatmul.f32.gmra.mxu0 %v264
    %v305 = vpop.f32.mrf.mxu0
    %v306 = vadd.f32 0.0, %v305
    %307 = vmatmul.f32.gmra.mxu0 %v265
    %v308 = vpop.f32.mrf.mxu0
    %v309 = vadd.f32 0.0, %v308
    %310 = vdwg.mxu0
    %v311 = vmax.f32 %v300, 1e-05
    %v312 = vmax.f32 %v303, 1e-05
    %v313 = vmax.f32 %v306, 1e-05
    %v314 = vmax.f32 %v309, 1e-05
    %v315 = vlog2.pop %v311
    %v316 = vmul.f32 %v315, 0.6931472
    %v317 = vlog2.pop %v312
    %v318 = vmul.f32 %v317, 0.6931472
    %v319 = vlog2.pop %v313
    %v320 = vmul.f32 %v319, 0.6931472
    %v321 = vlog2.pop %v314
    %v322 = vmul.f32 %v321, 0.6931472
    %323 = vst [vmem:[#allocation8] sm:$0xff] %v316
    %324 = vst [vmem:[#allocation8 + $0x8] sm:$0xff] %v318
    %325 = vst [vmem:[#allocation8 + $0x10] sm:$0xff] %v320
    %326 = vst [vmem:[#allocation8 + $0x18] sm:$0xff] %v322
    // Predicated region
    $region26: #{tpu_custom_call.1} parent=1 // pred_check
      _
    $region27: #{tpu_custom_call.1} parent=1 // pred_check_branch
      %328 = sbr.rel (0) target = $region29
    $region28: #{tpu_custom_call.1} parent=1 // pred_region
      %330 = vsyncadd [#allocation4], 0
      %s331 = sshll.u32 [#allocation8], 4
      %s332 = int_to_ptr.vmem [resolvable:$true] %s331
      %s333 = sshll.u32 %s3, 4
      %s334 = int_to_ptr.hbm [resolvable:$true] %s333
      %339 = dma.vmem_to_hbm [thread:$0]  %s332, 512, %s334, [#allocation4], 128, 128, 8
    $region29: #{tpu_custom_call.1} parent=1 // pred_fallthru
      _
    // Predicated region
    $region30: #{tpu_custom_call.1} parent=1 // pred_check
      _
    $region31: #{tpu_custom_call.1} parent=1 // pred_check_branch
      %341 = sbr.rel (0) target = $region33
    $region32: #{tpu_custom_call.1} parent=1 // pred_region
      %343 = dma.done [#allocation4], 512
    $region33: #{tpu_custom_call.1} parent=1 // pred_fallthru
      _
    %344 = vsyncpa [#allocation3], 1
    %345 = vsyncpa [#allocation6], 1
    %346 = vsyncpa [#allocation4], 1

</llo_original>
